<compile_context>
chip_gen: v7x
topology: tpu7x:2x2x1
jax: 0.10.0
libtpu: 0.0.40
codegen_flags: <defaults>
</compile_context>

<pallas_src>
import math

import jax
import jax.numpy as jnp
from jax.experimental import pallas as pl
from jax.experimental.pallas import tpu as pltpu


# ----------------------------------------------------------------------------
# helpers
# ----------------------------------------------------------------------------
def _round_up(x, m):
    return ((x + m - 1) // m) * m


def _pad2d(a, rows, cols):
    pr, pc = rows - a.shape[0], cols - a.shape[1]
    if pr == 0 and pc == 0:
        return a
    return jnp.pad(a, ((0, pr), (0, pc)))


def _pick_tm(m):
    """M-tile: limit pad waste, keep >=2 tiles for medium M (v7x megacore)."""
    if m <= 128:
        return max(_round_up(m, 8), 8)
    if m <= 512:
        # two near-equal tiles: feeds both v7x TensorCores, minimal pad waste.
        return _round_up((m + 1) // 2, 8)
    for tm in (1024, 768, 512):
        if tm <= m and (_round_up(m, tm) - m) * 8 <= m:   # <=12.5% pad waste
            return tm
    n_tiles = -(-m // 512)
    return _round_up(-(-m // n_tiles), 8)


def _required_vmem_bytes(tm, tf, kk, d_model_p, in_it, out_it):
    """Double-buffered stream tiles + resident f32 accumulator (if kk > 1)."""
    req = 2 * tm * d_model_p * in_it            # x tile
    req += 2 * d_model_p * tf * in_it           # w1 tile
    req += 2 * tf * d_model_p * in_it           # w2 tile
    req += 2 * (tf + d_model_p) * 4             # bias tiles (f32)
    req += 2 * tm * d_model_p * out_it          # out tile
    if kk > 1:
        req += tm * d_model_p * 4               # f32 accumulator scratch
    return req


# ----------------------------------------------------------------------------
# kernels
# ----------------------------------------------------------------------------
def ffn_kernel_single(x_ref, w1_ref, b1_ref, w2_ref, b2_ref, o_ref):
    # Single reduction step: weights fully VMEM-resident, no accumulator.
    # x_ref: (TM, Dp)   w1_ref: (Dp, Fp)   w2_ref: (Fp, Dp)  -- canonical (K,N)
    h = jnp.dot(x_ref[...], w1_ref[...], preferred_element_type=jnp.float32)
    h = jnp.maximum(h + b1_ref[...], 0.0)                       # (TM, Fp) f32
    out = jnp.dot(h.astype(w2_ref.dtype), w2_ref[...],
                  preferred_element_type=jnp.float32) + b2_ref[...]
    o_ref[...] = out.astype(o_ref.dtype)


def ffn_kernel_acc(x_ref, w1_ref, b1_ref, w2_ref, b2_ref, o_ref, acc_ref):
    # Multi-step d_ff reduction (grid axis 1, "arbitrary", accumulator pattern).
    # x_ref: (TM, Dp)  w1_ref: (Dp, TF)  b1_ref: (1, TF)  w2_ref: (TF, Dp)
    k = pl.program_id(1)

    @pl.when(k == 0)
    def _():
        acc_ref[...] = jnp.zeros_like(acc_ref)

    h = jnp.dot(x_ref[...], w1_ref[...], preferred_element_type=jnp.float32)
    h = jnp.maximum(h + b1_ref[...], 0.0)                       # (TM, TF) f32
    acc_ref[...] += jnp.dot(h.astype(w2_ref.dtype), w2_ref[...],
                            preferred_element_type=jnp.float32)

    @pl.when(k == pl.num_programs(1) - 1)
    def _():
        o_ref[...] = (acc_ref[...] + b2_ref[...]).astype(o_ref.dtype)


# ----------------------------------------------------------------------------
# parameter preparation (hoisted out of the per-call path)
# ----------------------------------------------------------------------------
def prepare_ffn_params(w1, b1, w2, b2, *, compute_dtype=jnp.bfloat16,
                       lane_mult=128):
    """Pad / cast / transpose the weights ONCE (parameter-load time).

    w1: (d_ff, d_model), b1: (d_ff,)   -- PyTorch nn.Linear layout
    w2: (d_model, d_ff), b2: (d_model,)
    Weights are stored in canonical (K, N) layout so both kernel matmuls
    contract dim 0 of the RHS (no per-step MXU-path transposes).
    """
    d_ff, d_model = w1.shape
    cd = jnp.dtype(compute_dtype)
    d_model_p = _round_up(d_model, lane_mult)
    d_ff_p = _round_up(d_ff, lane_mult)
    w1p = _pad2d(jnp.asarray(w1).T.astype(cd), d_model_p, d_ff_p)   # (Dp, Fp)
    w2p = _pad2d(jnp.asarray(w2).T.astype(cd), d_ff_p, d_model_p)   # (Fp, Dp)
    b1p = _pad2d(jnp.asarray(b1).reshape(1, d_ff).astype(jnp.float32), 1, d_ff_p)
    b2p = _pad2d(jnp.asarray(b2).reshape(1, d_model).astype(jnp.float32), 1, d_model_p)
    return dict(w1=w1p, b1=b1p, w2=w2p, b2=b2p,
                d_model=d_model, d_ff=d_ff,
                d_model_p=d_model_p, d_ff_p=d_ff_p,
                compute_dtype=cd)


# ----------------------------------------------------------------------------
# forward
# ----------------------------------------------------------------------------
def feed_forward(x, params, *, tile_f=None):
    """Pallas FeedForward: linear2(relu(linear1(x))).  x: [..., d_model]."""
    d_model = params["d_model"]
    d_ff = params["d_ff"]
    d_model_p = params["d_model_p"]
    d_ff_p = params["d_ff_p"]
    cd = params["compute_dtype"]
    w1p, b1p, w2p, b2p = params["w1"], params["b1"], params["w2"], params["b2"]

    lead = x.shape[:-1]
    m = int(math.prod(lead)) if lead else 1
    out_dtype = x.dtype
    in_it = jnp.dtype(cd).itemsize
    out_it = jnp.dtype(out_dtype).itemsize

    # ---- generation-aware VMEM budget -----------------------------------
    try:
        vmem_cap = int(pltpu.get_tpu_info().vmem_capacity_bytes)
    except Exception:
        vmem_cap = 64 << 20      # smallest per-core VMEM (v7x) as a safe floor
    cap = int(vmem_cap * 0.85)

    # ---- tile selection ---------------------------------------------------
    tm = _pick_tm(m)
    tf_cands = sorted({t for t in (d_ff_p, 4096, 2048, 1024, 768, 512, 384, 256, 128)
                       if t <= d_ff_p and d_ff_p % t == 0}, reverse=True)
    if tile_f is not None:       # (testing hook) upper-bound the d_ff tile
        tf_cands = [t for t in tf_cands if t <= tile_f] or [tf_cands[-1]]

    tf = tf_cands[-1]
    found = False
    while not found:
        for cand in tf_cands:
            kk = d_ff_p // cand
            if _required_vmem_bytes(tm, cand, kk, d_model_p, in_it, out_it) <= cap:
                tf, found = cand, True
                break
        if not found:
            if tm > 8:
                tm = max(8, _round_up(tm // 2, 8))
            else:
                found = True     # pathological d_model; let Mosaic try anyway
    kk = d_ff_p // tf
    m_p = _round_up(m, tm)

    required = _required_vmem_bytes(tm, tf, kk, d_model_p, in_it, out_it)
    vmem_limit = min(max(required + (4 << 20), 16 << 20), int(vmem_cap * 0.9))
    vmem_limit = int(max(vmem_limit, required + (1 << 20)))   # never below need

    # ---- pad the activation (only per-call data movement) ------------------
    x2d = _pad2d(x.reshape(m, d_model).astype(cd), m_p, d_model_p)

    cost = pl.CostEstimate(
        flops=4 * m * d_model * d_ff,                    # two matmuls
        transcendentals=0,
        bytes_accessed=int(x2d.size * in_it
                           + (w1p.size + w2p.size) * in_it
                           + (b1p.size + b2p.size) * 4
                           + m_p * d_model_p * out_it),
    )

    if kk == 1:
        # Fast path: one reduction step, weights resident, no accumulator.
        out2d = pl.pallas_call(
            ffn_kernel_single,
            out_shape=jax.ShapeDtypeStruct((m_p, d_model_p), out_dtype),
            grid_spec=pltpu.PrefetchScalarGridSpec(
                num_scalar_prefetch=0,
                grid=(m_p // tm,),
                in_specs=[
                    pl.BlockSpec((tm, d_model_p),     lambda i: (i, 0)),  # x
                    pl.BlockSpec((d_model_p, d_ff_p), lambda i: (0, 0)),  # w1 (K,N)
                    pl.BlockSpec((1, d_ff_p),         lambda i: (0, 0)),  # b1
                    pl.BlockSpec((d_ff_p, d_model_p), lambda i: (0, 0)),  # w2 (K,N)
                    pl.BlockSpec((1, d_model_p),      lambda i: (0, 0)),  # b2
                ],
                out_specs=pl.BlockSpec((tm, d_model_p), lambda i: (i, 0)),
            ),
            compiler_params=pltpu.CompilerParams(
                dimension_semantics=("parallel",),
                vmem_limit_bytes=vmem_limit,
            ),
            cost_estimate=cost,
        )(x2d, w1p, b1p, w2p, b2p)
    else:
        # Multi-step reduction over d_ff (last / "arbitrary" grid axis).
        out2d = pl.pallas_call(
            ffn_kernel_acc,
            out_shape=jax.ShapeDtypeStruct((m_p, d_model_p), out_dtype),
            grid_spec=pltpu.PrefetchScalarGridSpec(
                num_scalar_prefetch=0,
                grid=(m_p // tm, kk),
                in_specs=[
                    pl.BlockSpec((tm, d_model_p), lambda i, k: (i, 0)),   # x (resident over k)
                    pl.BlockSpec((d_model_p, tf), lambda i, k: (0, k)),   # w1 tile (K,N)
                    pl.BlockSpec((1, tf),         lambda i, k: (0, k)),   # b1 tile
                    pl.BlockSpec((tf, d_model_p), lambda i, k: (k, 0)),   # w2 tile (K,N)
                    pl.BlockSpec((1, d_model_p),  lambda i, k: (0, 0)),   # b2
                ],
                out_specs=pl.BlockSpec((tm, d_model_p), lambda i, k: (i, 0)),
                scratch_shapes=[pltpu.VMEM((tm, d_model_p), jnp.float32)],
            ),
            compiler_params=pltpu.CompilerParams(
                dimension_semantics=("parallel", "arbitrary"),
                vmem_limit_bytes=vmem_limit,
            ),
            cost_estimate=cost,
        )(x2d, w1p, b1p, w2p, b2p)

    out2d = out2d[:m, :d_model]
    return out2d.reshape(*lead, d_model)


# ----------------------------------------------------------------------------
# demo / self-test
# ----------------------------------------------------------------------------
if __name__ == "__main__":
    # Small shapes consistent with the module: batch=2, seq=8, d_model=32, d_ff=64
    batch, seq, d_model, d_ff = 2, 8, 32, 64

    key = jax.random.PRNGKey(0)
    kx, k1, k2, k3, k4 = jax.random.split(key, 5)

    x = jax.random.normal(kx, (batch, seq, d_model), dtype=jnp.float32)

    # PyTorch nn.Linear-style uniform(-1/sqrt(fan_in), 1/sqrt(fan_in)) init
    bound1 = 1.0 / (d_model ** 0.5)
    w1 = jax.random.uniform(k1, (d_ff, d_model), jnp.float32, -bound1, bound1)
    b1 = jax.random.uniform(k2, (d_ff,), jnp.float32, -bound1, bound1)
    bound2 = 1.0 / (d_ff ** 0.5)
    w2 = jax.random.uniform(k3, (d_model, d_ff), jnp.float32, -bound2, bound2)
    b2 = jax.random.uniform(k4, (d_model,), jnp.float32, -bound2, bound2)

    # Reference: same math as the PyTorch forward
    ref = jnp.maximum(x @ w1.T + b1, 0.0) @ w2.T + b2

    # 1) f32 compute path (tight check of the kernel math; single-k fast path)
    p32 = prepare_ffn_params(w1, b1, w2, b2, compute_dtype=jnp.float32)
    out32 = jax.block_until_ready(feed_forward(x, p32))
    assert out32.shape == (batch, seq, d_model)
    assert jnp.allclose(out32, ref, atol=1e-4, rtol=1e-4)

    # 2) default bf16 compute (recommended on v5e/v6e/v7x); mixed-precision tol
    pbf = prepare_ffn_params(w1, b1, w2, b2)
    outbf = jax.block_until_ready(feed_forward(x, pbf))
    assert jnp.allclose(outbf, ref, atol=5e-2, rtol=5e-2)

    # 3) exercise the multi-step reduction (accumulator) path: d_ff=256, tf=128
    d_ff2 = 256
    w1b = jax.random.uniform(k1, (d_ff2, d_model), jnp.float32, -bound1, bound1)
    b1b = jax.random.uniform(k2, (d_ff2,), jnp.float32, -bound1, bound1)
    bound2b = 1.0 / (d_ff2 ** 0.5)
    w2b = jax.random.uniform(k3, (d_model, d_ff2), jnp.float32, -bound2b, bound2b)
    b2b = jax.random.uniform(k4, (d_model,), jnp.float32, -bound2b, bound2b)
    refb = jnp.maximum(x @ w1b.T + b1b, 0.0) @ w2b.T + b2b
    pb = prepare_ffn_params(w1b, b1b, w2b, b2b, compute_dtype=jnp.float32)
    outb = jax.block_until_ready(feed_forward(x, pb, tile_f=128))
    assert jnp.allclose(outb, refb, atol=1e-4, rtol=1e-4)

    print("KERNEL_OK")
</pallas_src>

<mosaic_0001>
module attributes {stable_mosaic.version = 11 : i64} {
  func.func @ffn_kernel_single(%arg0: i32, %arg1: memref<16x128xf32, #tpu.memory_space<vmem>>, %arg2: memref<128x128xf32, #tpu.memory_space<vmem>>, %arg3: memref<1x128xf32, #tpu.memory_space<vmem>>, %arg4: memref<128x128xf32, #tpu.memory_space<vmem>>, %arg5: memref<1x128xf32, #tpu.memory_space<vmem>>, %arg6: memref<16x128xf32, #tpu.memory_space<vmem>>) attributes {dimension_semantics = [#tpu.dimension_semantics<parallel>], iteration_bounds = array<i64: 1>, scalar_prefetch = 0 : i64, scratch_operands = 0 : i64, tpu.core_type = #tpu.core_type<tc>, window_params = [{transform_indices = @transform_0, window_bounds = array<i64: 16, 128>}, {pipeline_mode = #tpu.pipeline_mode<synchronous>, transform_indices = @transform_1, window_bounds = array<i64: 128, 128>}, {pipeline_mode = #tpu.pipeline_mode<synchronous>, transform_indices = @transform_2, window_bounds = array<i64: 1, 128>}, {pipeline_mode = #tpu.pipeline_mode<synchronous>, transform_indices = @transform_3, window_bounds = array<i64: 128, 128>}, {pipeline_mode = #tpu.pipeline_mode<synchronous>, transform_indices = @transform_4, window_bounds = array<i64: 1, 128>}, {transform_indices = @transform_5, window_bounds = array<i64: 16, 128>}]} {
    %c0 = arith.constant 0 : index
    %c0_0 = arith.constant 0 : index
    %0 = vector.load %arg1[%c0, %c0_0] : memref<16x128xf32, #tpu.memory_space<vmem>>, vector<16x128xf32>
    %c0_1 = arith.constant 0 : index
    %c0_2 = arith.constant 0 : index
    %1 = vector.load %arg2[%c0_1, %c0_2] : memref<128x128xf32, #tpu.memory_space<vmem>>, vector<128x128xf32>
    %cst = arith.constant dense<0.000000e+00> : vector<16x128xf32>
    %2 = tpu.matmul %0, %1, %cst {dimension_numbers = #tpu.dot_dimension_numbers<[1], [0], [0], [1], [0, 0, 1, 1], [], []>} : vector<16x128xf32>, vector<128x128xf32>, vector<16x128xf32> -> vector<16x128xf32>
    %c0_3 = arith.constant 0 : index
    %c0_4 = arith.constant 0 : index
    %3 = vector.load %arg3[%c0_3, %c0_4] : memref<1x128xf32, #tpu.memory_space<vmem>>, vector<1x128xf32>
    %4 = vector.broadcast %3 : vector<1x128xf32> to vector<16x128xf32>
    %5 = arith.addf %2, %4 : vector<16x128xf32>
    %cst_5 = arith.constant 0.000000e+00 : f32
    %6 = vector.broadcast %cst_5 : f32 to vector<16x128xf32>
    %7 = arith.maximumf %5, %6 : vector<16x128xf32>
    %c0_6 = arith.constant 0 : index
    %c0_7 = arith.constant 0 : index
    %8 = vector.load %arg4[%c0_6, %c0_7] : memref<128x128xf32, #tpu.memory_space<vmem>>, vector<128x128xf32>
    %cst_8 = arith.constant dense<0.000000e+00> : vector<16x128xf32>
    %9 = tpu.matmul %7, %8, %cst_8 {dimension_numbers = #tpu.dot_dimension_numbers<[1], [0], [0], [1], [0, 0, 1, 1], [], []>} : vector<16x128xf32>, vector<128x128xf32>, vector<16x128xf32> -> vector<16x128xf32>
    %c0_9 = arith.constant 0 : index
    %c0_10 = arith.constant 0 : index
    %10 = vector.load %arg5[%c0_9, %c0_10] : memref<1x128xf32, #tpu.memory_space<vmem>>, vector<1x128xf32>
    %11 = vector.broadcast %10 : vector<1x128xf32> to vector<16x128xf32>
    %12 = arith.addf %9, %11 : vector<16x128xf32>
    %c0_11 = arith.constant 0 : index
    %c0_12 = arith.constant 0 : index
    %13 = vector.load %arg6[%c0_11, %c0_12] : memref<16x128xf32, #tpu.memory_space<vmem>>, vector<16x128xf32>
    tpu.vector_store %arg6[%c0_11, %c0_12], %12 {strides = array<i32>} : memref<16x128xf32, #tpu.memory_space<vmem>>, vector<16x128xf32>,
    return
  }
  func.func @transform_0(%arg0: i32) -> (i32, i32) {
    %c0_i32 = arith.constant 0 : i32
    %c0_i32_0 = arith.constant 0 : i32
    return %arg0, %c0_i32 : i32, i32
  }
  func.func @transform_1(%arg0: i32) -> (i32, i32) {
    %c0_i32 = arith.constant 0 : i32
    %c0_i32_0 = arith.constant 0 : i32
    %c0_i32_1 = arith.constant 0 : i32
    return %c0_i32, %c0_i32_0 : i32, i32
  }
  func.func @transform_2(%arg0: i32) -> (i32, i32) {
    %c0_i32 = arith.constant 0 : i32
    %c0_i32_0 = arith.constant 0 : i32
    %c0_i32_1 = arith.constant 0 : i32
    return %c0_i32, %c0_i32_0 : i32, i32
  }
  func.func @transform_3(%arg0: i32) -> (i32, i32) {
    %c0_i32 = arith.constant 0 : i32
    %c0_i32_0 = arith.constant 0 : i32
    %c0_i32_1 = arith.constant 0 : i32
    return %c0_i32, %c0_i32_0 : i32, i32
  }
  func.func @transform_4(%arg0: i32) -> (i32, i32) {
    %c0_i32 = arith.constant 0 : i32
    %c0_i32_0 = arith.constant 0 : i32
    %c0_i32_1 = arith.constant 0 : i32
    return %c0_i32, %c0_i32_0 : i32, i32
  }
  func.func @transform_5(%arg0: i32) -> (i32, i32) {
    %c0_i32 = arith.constant 0 : i32
    %c0_i32_0 = arith.constant 0 : i32
    return %arg0, %c0_i32 : i32, i32
  }
}

</mosaic_0001>

<llo_original>
// kernel: tpu_custom_call.1
$region0: #{tpu_custom_call.1}
  #allocation0 [shape = 'u32[]', space=smem, size = 0x4, offset = 0x4, fixed_abs, tag = 'smem constant byte address 0x4 - core index']
  #allocation1 [shape = 'u32[144,128]{1,0:T(1,128)}', space=vmem, size = 0x12000, scoped, tag = 'internal scratch']
  %s0 = inlined_call_operand.hbm [shape: f32[16,128], index: 0, kind: input, shape index: {}]
  %s1 = inlined_call_operand.hbm [shape: f32[128,128], index: 1, kind: input, shape index: {}]
  %s2 = inlined_call_operand.vmem [shape: f32[1,128], index: 2, kind: input, shape index: {}]
  %s3 = inlined_call_operand.hbm [shape: f32[128,128], index: 3, kind: input, shape index: {}]
  %s4 = inlined_call_operand.vmem [shape: f32[1,128], index: 4, kind: input, shape index: {}]
  %s5 = inlined_call_operand.hbm [shape: f32[16,128], index: 5, kind: output, shape index: {}]
  %s6 = sld [smem:[#allocation0]]
  $region42: #{tpu_custom_call.1} parent=0
    _
  %s8 = ssub.s32 1, %s6
  %s9 = scalar_select 0, %s8, %s6
  $region1: #{tpu_custom_call.1} parent=0
    #allocation2 [shape = 'u8[8192]{0}', space=vmem, size = 0x2000, scoped, tag = 'input window, operand 0, single buffered']
    #allocation3 [shape = 's32[1]{0}', space=sflag, size = 0x4, scoped, tag = 'scoped memory for tpu_custom_call.1']
    #allocation4 [shape = 's32[1]{0}', space=sflag, size = 0x4, scoped, tag = 'scoped memory for tpu_custom_call.1']
    #allocation5 [shape = 'u8[65536]{0}', space=vmem, size = 0x10000, scoped, tag = 'input window, operand 1, single buffered']
    #allocation6 [shape = 's32[1]{0}', space=sflag, size = 0x4, scoped, tag = 'scoped memory for tpu_custom_call.1']
    #allocation7 [shape = 'u8[65536]{0}', space=vmem, size = 0x10000, scoped, tag = 'input window, operand 3, single buffered']
    #allocation8 [shape = 'u8[8192]{0}', space=vmem, size = 0x2000, scoped, tag = 'output window, operand 0, single buffered']
    %10 = vsyncpa [#allocation3], 0
    %11 = vsyncpa [#allocation6], 0
    %12 = vsyncpa [#allocation4], 0
    // Predicated region
    $region2: #{tpu_custom_call.1} parent=1 // pred_check
      _
    $region3: #{tpu_custom_call.1} parent=1 // pred_check_branch
      %14 = sbr.rel (0) target = $region5
    $region4: #{tpu_custom_call.1} parent=1 // pred_region
      %s16 = ssub.s32 256, 256
      %17 = vsyncadd [#allocation3], %s16
      %s18 = sshll.u32 [#allocation2], 4
      %s19 = int_to_ptr.vmem [resolvable:$true] %s18
      %24 = dma.hbm_to_vmem [thread:$0]  %s0, 256, %s19, [#allocation3], 128, 128, 8
    $region5: #{tpu_custom_call.1} parent=1 // pred_fallthru
      _
    // Predicated region
    $region6: #{tpu_custom_call.1} parent=1 // pred_check
      _
    $region7: #{tpu_custom_call.1} parent=1 // pred_check_branch
      %26 = sbr.rel (0) target = $region9
    $region8: #{tpu_custom_call.1} parent=1 // pred_region
      %s28 = ssub.s32 2048, 2048
      %29 = vsyncadd [#allocation6], %s28
      %s30 = sshll.u32 [#allocation5], 4
      %s31 = int_to_ptr.vmem [resolvable:$true] %s30
      %36 = dma.hbm_to_vmem [thread:$0]  %s1, 2048, %s31, [#allocation6], 128, 128, 8
    $region9: #{tpu_custom_call.1} parent=1 // pred_fallthru
      _
    // Predicated region
    $region10: #{tpu_custom_call.1} parent=1 // pred_check
      _
    $region11: #{tpu_custom_call.1} parent=1 // pred_check_branch
      %38 = sbr.rel (0) target = $region13
    $region12: #{tpu_custom_call.1} parent=1 // pred_region
      _
    $region13: #{tpu_custom_call.1} parent=1 // pred_fallthru
      _
    // Predicated region
    $region14: #{tpu_custom_call.1} parent=1 // pred_check
      _
    $region15: #{tpu_custom_call.1} parent=1 // pred_check_branch
      %40 = sbr.rel (0) target = $region17
    $region16: #{tpu_custom_call.1} parent=1 // pred_region
      %s42 = ssub.s32 2048, 2048
      %43 = vsyncadd [#allocation6], %s42
      %s44 = sshll.u32 [#allocation7], 4
      %s45 = int_to_ptr.vmem [resolvable:$true] %s44
      %50 = dma.hbm_to_vmem [thread:$0]  %s3, 2048, %s45, [#allocation6], 128, 128, 8
    $region17: #{tpu_custom_call.1} parent=1 // pred_fallthru
      _
    // Predicated region
    $region18: #{tpu_custom_call.1} parent=1 // pred_check
      _
    $region19: #{tpu_custom_call.1} parent=1 // pred_check_branch
      %52 = sbr.rel (0) target = $region21
    $region20: #{tpu_custom_call.1} parent=1 // pred_region
      _
    $region21: #{tpu_custom_call.1} parent=1 // pred_fallthru
      _
    // Predicated region
    $region22: #{tpu_custom_call.1} parent=1 // pred_check
      _
    $region23: #{tpu_custom_call.1} parent=1 // pred_check_branch
      %54 = sbr.rel (0) target = $region25
    $region24: #{tpu_custom_call.1} parent=1 // pred_region
      %55 = dma.done [#allocation3], 256
    $region25: #{tpu_custom_call.1} parent=1 // pred_fallthru
      _
    // Predicated region
    $region26: #{tpu_custom_call.1} parent=1 // pred_check
      _
    $region27: #{tpu_custom_call.1} parent=1 // pred_check_branch
      %57 = sbr.rel (0) target = $region29
    $region28: #{tpu_custom_call.1} parent=1 // pred_region
      %58 = dma.done [#allocation6], 2048
    $region29: #{tpu_custom_call.1} parent=1 // pred_fallthru
      _
    // Predicated region
    $region30: #{tpu_custom_call.1} parent=1 // pred_check
      _
    $region31: #{tpu_custom_call.1} parent=1 // pred_check_branch
      %60 = sbr.rel (0) target = $region33
    $region32: #{tpu_custom_call.1} parent=1 // pred_region
      %61 = dma.done [#allocation6], 2048
    $region33: #{tpu_custom_call.1} parent=1 // pred_fallthru
      _
    %v62 = vld [vmem:[#allocation2] sm:$0xff]
    %v63 = vld [vmem:[#allocation2 + $0x8] sm:$0xff]
    %v64 = vld [vmem:[#allocation5] sm:$0xff]
    %v65 = vld [vmem:[#allocation5 + $0x8] sm:$0xff]
    %v66 = vld [vmem:[#allocation5 + $0x10] sm:$0xff]
    %v67 = vld [vmem:[#allocation5 + $0x18] sm:$0xff]
    %v68 = vld [vmem:[#allocation5 + $0x20] sm:$0xff]
    %v69 = vld [vmem:[#allocation5 + $0x28] sm:$0xff]
    %v70 = vld [vmem:[#allocation5 + $0x30] sm:$0xff]
    %v71 = vld [vmem:[#allocation5 + $0x38] sm:$0xff]
    %v72 = vld [vmem:[#allocation5 + $0x40] sm:$0xff]
    %v73 = vld [vmem:[#allocation5 + $0x48] sm:$0xff]
    %v74 = vld [vmem:[#allocation5 + $0x50] sm:$0xff]
    %v75 = vld [vmem:[#allocation5 + $0x58] sm:$0xff]
    %v76 = vld [vmem:[#allocation5 + $0x60] sm:$0xff]
    %v77 = vld [vmem:[#allocation5 + $0x68] sm:$0xff]
    %v78 = vld [vmem:[#allocation5 + $0x70] sm:$0xff]
    %v79 = vld [vmem:[#allocation5 + $0x78] sm:$0xff]
    %v80 = vld [vmem:[%s2] sm:$0x1]
    %v82 = vlaneseq
    %v83 = vshrl.u32 %v82, 7
    %v84 = vsub.s32 0, %v83
    %v85 = vrot.slane %v80, %v84
    %87 = vmatprep.subr.mxu0 0.0
    %88 = vmatpush1.msra.mxu0 %v64
    %89 = vmatprep.subr.mxu0 0.0
    %90 = vmatpush1.msra.mxu0 %v65
    %91 = vmatprep.subr.mxu0 0.0
    %92 = vmatpush1.msra.mxu0 %v66
    %93 = vmatprep.subr.mxu0 0.0
    %94 = vmatpush1.msra.mxu0 %v67
    %95 = vmatprep.subr.mxu0 0.0
    %96 = vmatpush1.msra.mxu0 %v68
    %97 = vmatprep.subr.mxu0 0.0
    %98 = vmatpush1.msra.mxu0 %v69
    %99 = vmatprep.subr.mxu0 0.0
    %100 = vmatpush1.msra.mxu0 %v70
    %101 = vmatprep.subr.mxu0 0.0
    %102 = vmatpush1.msra.mxu0 %v71
    %103 = vmatprep.subr.mxu0 0.0
    %104 = vmatpush1.msra.mxu0 %v72
    %105 = vmatprep.subr.mxu0 0.0
    %106 = vmatpush1.msra.mxu0 %v73
    %107 = vmatprep.subr.mxu0 0.0
    %108 = vmatpush1.msra.mxu0 %v74
    %109 = vmatprep.subr.mxu0 0.0
    %110 = vmatpush1.msra.mxu0 %v75
    %111 = vmatprep.subr.mxu0 0.0
    %112 = vmatpush1.msra.mxu0 %v76
    %113 = vmatprep.subr.mxu0 0.0
    %114 = vmatpush1.msra.mxu0 %v77
    %115 = vmatprep.subr.mxu0 0.0
    %116 = vmatpush1.msra.mxu0 %v78
    %117 = vmatprep.subr.mxu0 0.0
    %118 = vmatpush1.msra.mxu0 %v79
    %119 = vmatprep.subr.mxu0 0.0
    %120 = vmatpush1.msra.mxu0 0.0
    %121 = vmatprep.subr.mxu0 0.0
    %122 = vmatpush1.msra.mxu0 0.0
    %123 = vmatprep.subr.mxu0 0.0
    %124 = vmatpush1.msra.mxu0 0.0
    %125 = vmatprep.subr.mxu0 0.0
    %126 = vmatpush1.msra.mxu0 0.0
    %127 = vmatprep.subr.mxu0 0.0
    %128 = vmatpush1.msra.mxu0 0.0
    %129 = vmatprep.subr.mxu0 0.0
    %130 = vmatpush1.msra.mxu0 0.0
    %131 = vmatprep.subr.mxu0 0.0
    %132 = vmatpush1.msra.mxu0 0.0
    %133 = vmatprep.subr.mxu0 0.0
    %134 = vmatpush1.msra.mxu0 0.0
    %135 = vmatprep.subr.mxu0 0.0
    %136 = vmatpush1.msra.mxu0 0.0
    %137 = vmatprep.subr.mxu0 0.0
    %138 = vmatpush1.msra.mxu0 0.0
    %139 = vmatprep.subr.mxu0 0.0
    %140 = vmatpush1.msra.mxu0 0.0
    %141 = vmatprep.subr.mxu0 0.0
    %142 = vmatpush1.msra.mxu0 0.0
    %143 = vmatprep.subr.mxu0 0.0
    %144 = vmatpush1.msra.mxu0 0.0
    %145 = vmatprep.subr.mxu0 0.0
    %146 = vmatpush1.msra.mxu0 0.0
    %147 = vmatprep.subr.mxu0 0.0
    %148 = vmatpush1.msra.mxu0 0.0
    %149 = vmatprep.subr.mxu0 0.0
    %150 = vmatpush1.msra.mxu0 0.0
    %151 = vmatprep.mubr.f32.mxu0 0.0
    %152 = vmatmul.mubr.f32.gmra.mrb[0].mxu0 %v62
    %v153 = vpop.f32.mrb[0].mxu0
    %v154 = vadd.f32 %v85, %v153
    %v155 = vpop.f32.mrb[0].mxu0
    %156 = vmatprep.mubr.f32.mxu0 0.0
    %157 = vmatmul.mubr.f32.gmra.mrb[0].mxu0 %v63
    %v158 = vpop.f32.mrb[0].mxu0
    %v159 = vadd.f32 %v85, %v158
    %v160 = vpop.f32.mrb[0].mxu0
    %161 = vdwg.mxu0
    %v162 = vmax.f32 %v154, 0.0
    %v163 = vmax.f32 %v159, 0.0
    %v164 = vld [vmem:[#allocation7] sm:$0xff]
    %v165 = vld [vmem:[#allocation7 + $0x8] sm:$0xff]
    %v166 = vld [vmem:[#allocation7 + $0x10] sm:$0xff]
    %v167 = vld [vmem:[#allocation7 + $0x18] sm:$0xff]
    %v168 = vld [vmem:[#allocation7 + $0x20] sm:$0xff]
    %v169 = vld [vmem:[#allocation7 + $0x28] sm:$0xff]
    %v170 = vld [vmem:[#allocation7 + $0x30] sm:$0xff]
    %v171 = vld [vmem:[#allocation7 + $0x38] sm:$0xff]
    %v172 = vld [vmem:[#allocation7 + $0x40] sm:$0xff]
    %v173 = vld [vmem:[#allocation7 + $0x48] sm:$0xff]
    %v174 = vld [vmem:[#allocation7 + $0x50] sm:$0xff]
    %v175 = vld [vmem:[#allocation7 + $0x58] sm:$0xff]
    %v176 = vld [vmem:[#allocation7 + $0x60] sm:$0xff]
    %v177 = vld [vmem:[#allocation7 + $0x68] sm:$0xff]
    %v178 = vld [vmem:[#allocation7 + $0x70] sm:$0xff]
    %v179 = vld [vmem:[#allocation7 + $0x78] sm:$0xff]
    %v180 = vld [vmem:[%s4] sm:$0x1]
    %v182 = vlaneseq
    %v183 = vshrl.u32 %v182, 7
    %v184 = vsub.s32 0, %v183
    %v185 = vrot.slane %v180, %v184
    %187 = vmatprep.subr.mxu0 0.0
    %188 = vmatpush1.msra.mxu0 %v164
    %189 = vmatprep.subr.mxu0 0.0
    %190 = vmatpush1.msra.mxu0 %v165
    %191 = vmatprep.subr.mxu0 0.0
    %192 = vmatpush1.msra.mxu0 %v166
    %193 = vmatprep.subr.mxu0 0.0
    %194 = vmatpush1.msra.mxu0 %v167
    %195 = vmatprep.subr.mxu0 0.0
    %196 = vmatpush1.msra.mxu0 %v168
    %197 = vmatprep.subr.mxu0 0.0
    %198 = vmatpush1.msra.mxu0 %v169
    %199 = vmatprep.subr.mxu0 0.0
    %200 = vmatpush1.msra.mxu0 %v170
    %201 = vmatprep.subr.mxu0 0.0
    %202 = vmatpush1.msra.mxu0 %v171
    %203 = vmatprep.subr.mxu0 0.0
    %204 = vmatpush1.msra.mxu0 %v172
    %205 = vmatprep.subr.mxu0 0.0
    %206 = vmatpush1.msra.mxu0 %v173
    %207 = vmatprep.subr.mxu0 0.0
    %208 = vmatpush1.msra.mxu0 %v174
    %209 = vmatprep.subr.mxu0 0.0
    %210 = vmatpush1.msra.mxu0 %v175
    %211 = vmatprep.subr.mxu0 0.0
    %212 = vmatpush1.msra.mxu0 %v176
    %213 = vmatprep.subr.mxu0 0.0
    %214 = vmatpush1.msra.mxu0 %v177
    %215 = vmatprep.subr.mxu0 0.0
    %216 = vmatpush1.msra.mxu0 %v178
    %217 = vmatprep.subr.mxu0 0.0
    %218 = vmatpush1.msra.mxu0 %v179
    %219 = vmatprep.subr.mxu0 0.0
    %220 = vmatpush1.msra.mxu0 0.0
    %221 = vmatprep.subr.mxu0 0.0
    %222 = vmatpush1.msra.mxu0 0.0
    %223 = vmatprep.subr.mxu0 0.0
    %224 = vmatpush1.msra.mxu0 0.0
    %225 = vmatprep.subr.mxu0 0.0
    %226 = vmatpush1.msra.mxu0 0.0
    %227 = vmatprep.subr.mxu0 0.0
    %228 = vmatpush1.msra.mxu0 0.0
    %229 = vmatprep.subr.mxu0 0.0
    %230 = vmatpush1.msra.mxu0 0.0
    %231 = vmatprep.subr.mxu0 0.0
    %232 = vmatpush1.msra.mxu0 0.0
    %233 = vmatprep.subr.mxu0 0.0
    %234 = vmatpush1.msra.mxu0 0.0
    %235 = vmatprep.subr.mxu0 0.0
    %236 = vmatpush1.msra.mxu0 0.0
    %237 = vmatprep.subr.mxu0 0.0
    %238 = vmatpush1.msra.mxu0 0.0
    %239 = vmatprep.subr.mxu0 0.0
    %240 = vmatpush1.msra.mxu0 0.0
    %241 = vmatprep.subr.mxu0 0.0
    %242 = vmatpush1.msra.mxu0 0.0
    %243 = vmatprep.subr.mxu0 0.0
    %244 = vmatpush1.msra.mxu0 0.0
    %245 = vmatprep.subr.mxu0 0.0
    %246 = vmatpush1.msra.mxu0 0.0
    %247 = vmatprep.subr.mxu0 0.0
    %248 = vmatpush1.msra.mxu0 0.0
    %249 = vmatprep.subr.mxu0 0.0
    %250 = vmatpush1.msra.mxu0 0.0
    %251 = vmatprep.mubr.f32.mxu0 0.0
    %252 = vmatmul.mubr.f32.gmra.mrb[0].mxu0 %v162
    %v253 = vpop.f32.mrb[0].mxu0
    %v254 = vadd.f32 %v185, %v253
    %v255 = vpop.f32.mrb[0].mxu0
    %256 = vmatprep.mubr.f32.mxu0 0.0
    %257 = vmatmul.mubr.f32.gmra.mrb[0].mxu0 %v163
    %v258 = vpop.f32.mrb[0].mxu0
    %v259 = vadd.f32 %v185, %v258
    %v260 = vpop.f32.mrb[0].mxu0
    %261 = vdwg.mxu0
    %262 = vst [vmem:[#allocation8] sm:$0xff] %v254
    %263 = vst [vmem:[#allocation8 + $0x8] sm:$0xff] %v259
    // Predicated region
    $region34: #{tpu_custom_call.1} parent=1 // pred_check
      _
    $region35: #{tpu_custom_call.1} parent=1 // pred_check_branch
      %265 = sbr.rel (0) target = $region37
    $region36: #{tpu_custom_call.1} parent=1 // pred_region
      %s267 = ssub.s32 256, 256
      %268 = vsyncadd [#allocation4], %s267
      %s269 = sshll.u32 [#allocation8], 4
      %s270 = int_to_ptr.vmem [resolvable:$true] %s269
      %275 = dma.vmem_to_hbm [thread:$0]  %s270, 256, %s5, [#allocation4], 128, 128, 8
    $region37: #{tpu_custom_call.1} parent=1 // pred_fallthru
      _
    // Predicated region
    $region38: #{tpu_custom_call.1} parent=1 // pred_check
      _
    $region39: #{tpu_custom_call.1} parent=1 // pred_check_branch
      %277 = sbr.rel (0) target = $region41
    $region40: #{tpu_custom_call.1} parent=1 // pred_region
      %278 = dma.done [#allocation4], 256
    $region41: #{tpu_custom_call.1} parent=1 // pred_fallthru
      _
    %279 = vsyncpa [#allocation3], 1
    %280 = vsyncpa [#allocation6], 1
    %281 = vsyncpa [#allocation4], 1

</llo_original>
